<compile_context>
chip_gen: v5e
topology: v5e:2x2
jax: 0.10.0
libtpu: 0.0.40
codegen_flags: <defaults>
</compile_context>

<pallas_src>
import functools

import jax
import jax.numpy as jnp
from jax.experimental import pallas as pl
from jax.experimental.pallas import tpu as pltpu


_MAX_BLOCK_ROWS = 1024   # 1024 x 512 f32 = 2 MiB per tile
_BIT_DEPTH = 8
_LEVELS = float(2.0 ** _BIT_DEPTH - 1.0)


def _round_up(x: int, m: int) -> int:
    return ((x + m - 1) // m) * m


def _slab_layout(n: int):
    """Pick (lanes, padded_rows, block_rows) for the persistent lane-dense slab."""
    # Wide (512) lanes for big tensors; 128 lanes for small ones to avoid padding
    # blowup. Both are multiples of 128 -> unmasked full-width vector stores.
    lanes = 512 if n >= 512 * 64 else 128
    rows = _round_up(pl.cdiv(n, lanes), 8)           # sublane (8) aligned
    block_rows = min(_MAX_BLOCK_ROWS, rows)
    # Ensure >= 2 grid steps when there is enough data so the "parallel" grid
    # axis can be sharded across v7x's two TensorCores.
    if rows // block_rows < 2 and rows >= 16:
        block_rows = _round_up(pl.cdiv(rows, 2), 8)
    rows_padded = _round_up(rows, block_rows)        # padding happens ONCE, at init
    return lanes, rows_padded, block_rows


# ----------------------------- Pallas kernel ---------------------------------

def _quantize_kernel(x_ref, o_ref):
    # Elementwise 8-bit quantization: round((2^8-1) * x) / (2^8-1).
    x = x_ref[...].astype(jnp.float32)
    o_ref[...] = (jnp.round(_LEVELS * x) / _LEVELS).astype(o_ref.dtype)


@functools.partial(jax.jit, static_argnames=("block_rows",), donate_argnums=(0,))
def _quantize_slab(slab, *, block_rows):
    rows_padded, lanes = slab.shape
    grid = (rows_padded // block_rows,)
    return pl.pallas_call(
        _quantize_kernel,
        out_shape=jax.ShapeDtypeStruct(slab.shape, slab.dtype),
        grid_spec=pltpu.PrefetchScalarGridSpec(
            num_scalar_prefetch=0,
            grid=grid,
            in_specs=[pl.BlockSpec((block_rows, lanes), lambda i: (i, 0))],
            out_specs=pl.BlockSpec((block_rows, lanes), lambda i: (i, 0)),
        ),
        compiler_params=pltpu.CompilerParams(
            dimension_semantics=("parallel",)),
        input_output_aliases={0: 0},   # quantize updates the parameter in place
    )(slab)


# ----------------------------- Module wrapper ---------------------------------

class SLMLoaderPallas:
    """JAX/Pallas equivalent of the PyTorch SLMLoader module (RANDOM init)."""

    def __init__(self, tensor_shape, init_variance: float = 1.0,
                 flag_complex: bool = False, key=None):
        if key is None:
            key = jax.random.PRNGKey(0)
        k1, k2 = jax.random.split(key)
        phase = init_variance * jax.random.uniform(
            k1, tensor_shape, dtype=jnp.float32)
        if flag_complex:
            phase = phase + 1j * init_variance * jax.random.uniform(
                k2, tensor_shape, dtype=jnp.float32)

        self._shape = tuple(tensor_shape)
        self._n = int(phase.size)
        self.scale = jnp.ones(tensor_shape[:-2], dtype=jnp.float32)

        if not flag_complex:
            lanes, rows_padded, block_rows = _slab_layout(self._n)
            flat = phase.reshape(-1)
            pad = rows_padded * lanes - self._n
            if pad:
                flat = jnp.pad(flat, (0, pad))       # one-time; slab is persistent
            self._slab = flat.reshape(rows_padded, lanes)
            self._block_rows = block_rows
            self._phase = None
        else:
            self._slab = None
            self._block_rows = None
            self._phase = phase

    @property
    def phase(self):
        if self._slab is not None:
            return self._slab.reshape(-1)[: self._n].reshape(self._shape)
        return self._phase

    def forward(self, quantize: bool = False):
        if quantize:
            if self._slab is not None:
                # Pallas path: in-place elementwise quantize on the persistent slab.
                self._slab = _quantize_slab(self._slab, block_rows=self._block_rows)
            else:
                # TODO(synk): torch.round is undefined on complex tensors; quantize
                # the real part only and leave the imaginary part untouched.
                p = self._phase
                p = jnp.round(_LEVELS * p.real) / _LEVELS + 1j * p.imag
                self._phase = p
        return self.phase, self.scale

    __call__ = forward


# ----------------------------- Demo / check -----------------------------------

if __name__ == "__main__":
    # Small shape consistent with the module: batch=2, channels=4, 16x16 SLM plane.
    small_shape = (2, 4, 16, 16)
    loader = SLMLoaderPallas(small_shape, init_variance=1.0,
                             key=jax.random.PRNGKey(0))

    phase0, scale0 = loader(quantize=False)             # pass-through path
    ref = jnp.round(255.0 * phase0) / 255.0

    phase_q, scale_q = loader(quantize=True)            # Pallas kernel, in-place slab
    jax.block_until_ready((phase_q, scale_q))

    assert phase_q.shape == small_shape
    assert scale_q.shape == small_shape[:-2]
    assert jnp.allclose(phase_q, ref, atol=1e-6)
    assert jnp.allclose(scale_q, jnp.ones(small_shape[:-2]), atol=0)

    # Quantization is idempotent.
    phase_q2, _ = loader(quantize=True)
    jax.block_until_ready(phase_q2)
    assert jnp.allclose(phase_q2, phase_q, atol=1e-6)

    # Multi-block grid path (still modest): 2 x 4 x 128 x 256 f32 = 1 MiB.
    big_shape = (2, 4, 128, 256)
    big = SLMLoaderPallas(big_shape, init_variance=1.0,
                          key=jax.random.PRNGKey(1))
    p0, _ = big(quantize=False)
    pq, sq = big(quantize=True)
    jax.block_until_ready((pq, sq))
    assert pq.shape == big_shape
    assert sq.shape == big_shape[:-2]
    assert jnp.allclose(pq, jnp.round(255.0 * p0) / 255.0, atol=1e-6)

    print("KERNEL_OK")
</pallas_src>

<mosaic_0001>
module attributes {stable_mosaic.version = 11 : i64} {
  func.func @_quantize_kernel(%arg0: i32, %arg1: memref<8x128xf32, #tpu.memory_space<vmem>>, %arg2: memref<8x128xf32, #tpu.memory_space<vmem>>) attributes {dimension_semantics = [#tpu.dimension_semantics<parallel>], iteration_bounds = array<i64: 2>, scalar_prefetch = 0 : i64, scratch_operands = 0 : i64, tpu.core_type = #tpu.core_type<tc>, window_params = [{transform_indices = @transform_0, window_bounds = array<i64: 8, 128>}, {transform_indices = @transform_1, window_bounds = array<i64: 8, 128>}]} {
    %c0 = arith.constant 0 : index
    %c0_0 = arith.constant 0 : index
    %0 = vector.load %arg1[%c0, %c0_0] : memref<8x128xf32, #tpu.memory_space<vmem>>, vector<8x128xf32>
    %cst = arith.constant 2.550000e+02 : f32
    %1 = vector.broadcast %cst : f32 to vector<8x128xf32>
    %2 = arith.mulf %1, %0 : vector<8x128xf32>
    %3 = math.roundeven %2 : vector<8x128xf32>
    %cst_1 = arith.constant 2.550000e+02 : f32
    %4 = vector.broadcast %cst_1 : f32 to vector<8x128xf32>
    %5 = arith.divf %3, %4 : vector<8x128xf32>
    %c0_2 = arith.constant 0 : index
    %c0_3 = arith.constant 0 : index
    %6 = vector.load %arg2[%c0_2, %c0_3] : memref<8x128xf32, #tpu.memory_space<vmem>>, vector<8x128xf32>
    tpu.vector_store %arg2[%c0_2, %c0_3], %5 {strides = array<i32>} : memref<8x128xf32, #tpu.memory_space<vmem>>, vector<8x128xf32>,
    return
  }
  func.func @transform_0(%arg0: i32) -> (i32, i32) {
    %c0_i32 = arith.constant 0 : i32
    %c0_i32_0 = arith.constant 0 : i32
    return %arg0, %c0_i32 : i32, i32
  }
  func.func @transform_1(%arg0: i32) -> (i32, i32) {
    %c0_i32 = arith.constant 0 : i32
    %c0_i32_0 = arith.constant 0 : i32
    return %arg0, %c0_i32 : i32, i32
  }
}

</mosaic_0001>

<llo_original>
// kernel: _quantize_slab.1
$region0: #{_quantize_slab.1}
  #allocation0 [shape = 'u32[]', space=smem, size = 0x4, offset = 0x4, fixed_abs, tag = 'smem constant byte address 0x4 - core index']
  #allocation1 [shape = 'u32[72,128]{1,0:T(1,128)}', space=vmem, size = 0x9000, scoped, tag = 'internal scratch']
  %s0 = inlined_call_operand.hbm [shape: f32[16,128], index: 0, kind: input, shape index: {}, may-alias: {0,1}]
  %s1 = inlined_call_operand.hbm [shape: f32[16,128], index: 1, kind: output, shape index: {}, may-alias: {0,1}]
  %s2 = sld [smem:[#allocation0]]
  $region41: #{_quantize_slab.1} parent=0
    _
  %s4 = ssub.s32 1, %s2
  %s5 = scalar_select 0, %s4, %s2
  $region1: #{_quantize_slab.1} parent=0
    #allocation2 [shape = 'u8[8192]{0}', space=vmem, size = 0x2000, scoped, tag = 'input window, operand 0']
    #allocation3 [shape = 's32[2]{0}', space=sflag, size = 0x8, scoped, tag = 'scoped memory for _quantize_slab.1']
    #allocation4 [shape = 's32[2]{0}', space=sflag, size = 0x8, scoped, tag = 'scoped memory for _quantize_slab.1']
    #allocation5 [shape = 'u8[8192]{0}', space=vmem, size = 0x2000, scoped, tag = 'output window, operand 0']
    %6 = vsyncpa [#allocation3], 0
    %s7 = scalar_lea.sflag [#allocation3], 1
    %8 = vsyncpa %s7, 0
    %9 = vsyncpa [#allocation4], 0
    %s10 = scalar_lea.sflag [#allocation4], 1
    %11 = vsyncpa %s10, 0
    loop: start=0, step=1, limit=4
    $region2: #{_quantize_slab.1} parent=1 // loop_pre_header
      _
    $region3: #{_quantize_slab.1} parent=1 // loop_header
      %s13 = sphi 0, %s17
      %p14 = scmp.ge.s32.totalorder %s13, 4
      %s23 = sphi 0, %s25
      %s26 = sphi 0, %s23
      %s27 = sphi 0, %s26
      %s43 = sphi 0, %s27
      %s49 = sphi 0, %s51
      %s52 = sphi 0, %s49
      %s53 = sphi 0, %s52
      %s69 = sphi 0, %s53
    $region4: #{_quantize_slab.1} parent=1 // loop_header_branch
      %16 = sbr.rel (%p14) target = $region8
    $region5: #{_quantize_slab.1} parent=1 // loop_body
      %s18 = ssub.s32 %s13, 1
      %s19 = ssub.s32 %s13, 2
      %s20 = sadd.s32 %s13, 1
      %s21 = ssub.s32 %s13, %s20
      %p22 = scmp.eq.s32.totalorder %s21, 0
      %s24 = sadd.s32 %s23, 1
      %s25 = scalar_select %p22, %s23, %s24
      %p28 = pneg %p22
      %p29 = scmp.eq.s32.totalorder %s13, 1
      %p30 = por %p28, %p29
      %p31 = scmp.ne.s32.totalorder %s23, %s26
      %p32 = scmp.eq.s32.totalorder %s13, 0
      %p33 = por %p31, %p32
      %p34 = scmp.ne.s32.totalorder %s23, %s26
      %p35 = scmp.eq.s32.totalorder %s18, 1
      %p36 = por %p34, %p35
      %p37 = scmp.ne.s32.totalorder %s26, %s27
      %p38 = scmp.eq.s32.totalorder %s18, 0
      %p39 = por %p37, %p38
      %p40 = scmp.ne.s32.totalorder %s26, %s27
      %p41 = scmp.eq.s32.totalorder %s19, 1
      %p42 = por %p40, %p41
      %p44 = scmp.ne.s32.totalorder %s27, %s43
      %p45 = scmp.eq.s32.totalorder %s19, 0
      %p46 = por %p44, %p45
      %s47 = ssub.s32 %s13, %s20
      %p48 = scmp.eq.s32.totalorder %s47, 0
      %s50 = sadd.s32 %s49, 1
      %s51 = scalar_select %p48, %s49, %s50
      %p54 = pneg %p48
      %p55 = scmp.eq.s32.totalorder %s13, 1
      %p56 = por %p54, %p55
      %p57 = scmp.ne.s32.totalorder %s49, %s52
      %p58 = scmp.eq.s32.totalorder %s13, 0
      %p59 = por %p57, %p58
      %p60 = scmp.ne.s32.totalorder %s49, %s52
      %p61 = scmp.eq.s32.totalorder %s18, 1
      %p62 = por %p60, %p61
      %p63 = scmp.ne.s32.totalorder %s52, %s53
      %p64 = scmp.eq.s32.totalorder %s18, 0
      %p65 = por %p63, %p64
      %p66 = scmp.ne.s32.totalorder %s52, %s53
      %p67 = scmp.eq.s32.totalorder %s19, 1
      %p68 = por %p66, %p67
      %p70 = scmp.ne.s32.totalorder %s53, %s69
      %p71 = scmp.eq.s32.totalorder %s19, 0
      %p72 = por %p70, %p71
      %p73 = scmp.le.s32.totalorder 1, %s13
      %p74 = scmp.lt.s32.totalorder %s13, 3
      %p75 = pnand %p73, %p74
      %p76 = pneg %p75
      // Predicated region
      $region9: #{_quantize_slab.1} parent=5 // pred_check
        _
      $region10: #{_quantize_slab.1} parent=5 // pred_check_branch
        %78 = sbr.rel (%p75) target = $region12
      $region11: #{_quantize_slab.1} parent=5 // pred_region
        %s79 = ssub.s32 %s13, 1
      $region12: #{_quantize_slab.1} parent=5 // pred_fallthru
        _
      %p80 = scmp.lt.s32.totalorder %s13, 2
      // Predicated region
      $region13: #{_quantize_slab.1} parent=5 // pred_check
        %p81 = pneg %p80
      $region14: #{_quantize_slab.1} parent=5 // pred_check_branch
        %83 = sbr.rel (%p81) target = $region16
      $region15: #{_quantize_slab.1} parent=5 // pred_region
        // Predicated region
        $region17: #{_quantize_slab.1} parent=15 // pred_check
          %p84 = pneg %p33
        $region18: #{_quantize_slab.1} parent=15 // pred_check_branch
          %86 = sbr.rel (%p84) target = $region20
        $region19: #{_quantize_slab.1} parent=15 // pred_region
          %s87 = sand.u32 %s23, 1
          %s88 = scalar_lea.sflag [#allocation3], %s87
          %s89 = sand.u32 %s23, 1
          %s90 = smul.addr %s89, 8
          %s91 = scalar_lea.vmem [#allocation2], %s90
          %93 = vsyncadd %s88, 0
          %s94 = smul.addr %s13, 8
          %s95 = scalar_lea.hbm %s0, %s94
          %s97 = sshll.u32 %s95, 4
          %s98 = int_to_ptr.hbm [resolvable:$true] %s97
          %s99 = sshll.u32 %s91, 4
          %s100 = int_to_ptr.vmem [resolvable:$true] %s99
          %102 = dma.hbm_to_vmem [thread:$0]  %s98, 128, %s100, %s88
        $region20: #{_quantize_slab.1} parent=15 // pred_fallthru
          _
      $region16: #{_quantize_slab.1} parent=5 // pred_fallthru
        _
      %p103 = scmp.le.s32.totalorder 1, %s13
      %p104 = scmp.lt.s32.totalorder %s13, 3
      %p105 = pnand %p103, %p104
      %p106 = pneg %p105
      // Predicated region
      $region21: #{_quantize_slab.1} parent=5 // pred_check
        _
      $region22: #{_quantize_slab.1} parent=5 // pred_check_branch
        %108 = sbr.rel (%p105) target = $region24
      $region23: #{_quantize_slab.1} parent=5 // pred_region
        %s109 = ssub.s32 %s13, 1
        %s110 = sand.u32 %s26, 1
        %s111 = scalar_lea.sflag [#allocation3], %s110
        %s112 = sand.u32 %s26, 1
        %s113 = smul.addr %s112, 8
        %s114 = scalar_lea.vmem [#allocation2], %s113
        // Predicated region
        $region25: #{_quantize_slab.1} parent=23 // pred_check
          %p115 = pneg %p39
        $region26: #{_quantize_slab.1} parent=23 // pred_check_branch
          %117 = sbr.rel (%p115) target = $region28
        $region27: #{_quantize_slab.1} parent=23 // pred_region
          %119 = dma.done %s111, 128
        $region28: #{_quantize_slab.1} parent=23 // pred_fallthru
          _
        %s120 = sand.u32 %s26, 1
        %s121 = scalar_lea.sflag [#allocation3], %s120
        %s122 = sand.u32 %s26, 1
        %s123 = smul.addr %s122, 8
        %s124 = scalar_lea.vmem [#allocation2], %s123
        %p125 = pneg %p39
        %p126 = pneg %p36
        %p127 = pneg %p65
        %p128 = pneg %p62
        %s129 = sand.u32 %s52, 1
        %s130 = scalar_lea.sflag [#allocation4], %s129
        %s131 = sand.u32 %s52, 1
        %s132 = smul.addr %s131, 8
        %s133 = scalar_lea.vmem [#allocation5], %s132
        %v134 = vld [vmem:[%s114] sm:$0xff]
        %v135 = vmul.f32 %v134, 255.0
        %v136 = vround.ne.pseudo %v135
        %v137 = vrcp.pop 255.0
        %v138 = vmul.f32 255.0, %v137
        %v139 = vsub.f32 1.0, %v138
        %v140 = vmul.f32 %v137, %v139
        %v141 = vadd.f32 %v137, %v140
        %vm142 = vweird.f32 %v137
        %v143 = vsel %vm142, %v137, %v141
        %v144 = vmul.f32 %v136, %v143
        %145 = vst [vmem:[%s133] sm:$0xff] %v144
        %s146 = sand.u32 %s52, 1
        %s147 = scalar_lea.sflag [#allocation4], %s146
        %s148 = sand.u32 %s52, 1
        %s149 = smul.addr %s148, 8
        %s150 = scalar_lea.vmem [#allocation5], %s149
        // Predicated region
        $region29: #{_quantize_slab.1} parent=23 // pred_check
          %p151 = pneg %p62
        $region30: #{_quantize_slab.1} parent=23 // pred_check_branch
          %153 = sbr.rel (%p151) target = $region32
        $region31: #{_quantize_slab.1} parent=23 // pred_region
          %155 = vsyncadd %s147, 0
          %s156 = smul.addr %s18, 8
          %s157 = scalar_lea.hbm %s1, %s156
          %s159 = sshll.u32 %s150, 4
          %s160 = int_to_ptr.vmem [resolvable:$true] %s159
          %s161 = sshll.u32 %s157, 4
          %s162 = int_to_ptr.hbm [resolvable:$true] %s161
          %164 = dma.vmem_to_hbm [thread:$0]  %s160, 128, %s162, %s147
        $region32: #{_quantize_slab.1} parent=23 // pred_fallthru
          _
      $region24: #{_quantize_slab.1} parent=5 // pred_fallthru
        _
      %p165 = scmp.le.s32.totalorder 2, %s13
      // Predicated region
      $region33: #{_quantize_slab.1} parent=5 // pred_check
        %p166 = pneg %p165
      $region34: #{_quantize_slab.1} parent=5 // pred_check_branch
        %168 = sbr.rel (%p166) target = $region36
      $region35: #{_quantize_slab.1} parent=5 // pred_region
        %s169 = ssub.s32 %s13, 2
        // Predicated region
        $region37: #{_quantize_slab.1} parent=35 // pred_check
          %p170 = pneg %p68
        $region38: #{_quantize_slab.1} parent=35 // pred_check_branch
          %172 = sbr.rel (%p170) target = $region40
        $region39: #{_quantize_slab.1} parent=35 // pred_region
          %s173 = sand.u32 %s53, 1
          %s174 = scalar_lea.sflag [#allocation4], %s173
          %s175 = sand.u32 %s53, 1
          %s176 = smul.addr %s175, 8
          %s177 = scalar_lea.vmem [#allocation5], %s176
          %179 = dma.done %s174, 128
        $region40: #{_quantize_slab.1} parent=35 // pred_fallthru
          _
      $region36: #{_quantize_slab.1} parent=5 // pred_fallthru
        _
    $region6: #{_quantize_slab.1} parent=1 // loop_footer
      %s17 = sadd.s32 1, %s13
    $region7: #{_quantize_slab.1} parent=1 // loop_footer_branch
      %12 = sbr.rel target = $region3
    $region8: #{_quantize_slab.1} parent=1 // loop_exit
      _
    %180 = vsyncpa [#allocation3], 1
    %s181 = scalar_lea.sflag [#allocation3], 1
    %182 = vsyncpa %s181, 1
    %183 = vsyncpa [#allocation4], 1
    %s184 = scalar_lea.sflag [#allocation4], 1
    %185 = vsyncpa %s184, 1

</llo_original>
